<compile_context>
chip_gen: v6e
topology: v6e:2x2x1
jax: 0.10.0
libtpu: 0.0.40
codegen_flags: <defaults>
</compile_context>

<pallas_src>
import functools

import jax
import jax.numpy as jnp
from jax.experimental import pallas as pl
from jax.experimental.pallas import tpu as pltpu


def encode_patches_kernel(x_ref, w_ref, posb_ref, o_ref, *, batch):
    """Single grid step.

    x_ref:    (M, Dp)   all patches, rows ordered (b-major, n-minor), M = B*N
    w_ref:    (Dp, Do)  projection weight (in, out)
    posb_ref: (N, Do)   positional embedding table with bias pre-folded in
    o_ref:    (M, Do)   output rows
    """
    y = jnp.dot(x_ref[...], w_ref[...],
                preferred_element_type=jnp.float32)       # one MXU matmul, M=B*N
    posb = jnp.tile(posb_ref[...], (batch, 1))            # (M, Do), VMEM-only copy
    o_ref[...] = (y + posb).astype(o_ref.dtype)


def encode_patches_forward(patch, w, b, pos_emb):
    """patch: (B, N, patch_dim); w: (patch_dim, project_dim); b: (project_dim,);
    pos_emb: (N, project_dim).  Returns (B, N, project_dim)."""
    B, N, Dp = patch.shape
    Do = w.shape[1]
    M = B * N

    # Free relabels / tiny folds in the wrapper (no padding, no slicing).
    x2 = patch.reshape(M, Dp)          # contiguous reshape: no HBM copy
    posb = pos_emb + b[None, :]        # fold bias into pos table (N x Do, tiny)

    kernel = functools.partial(encode_patches_kernel, batch=B)

    out2 = pl.pallas_call(
        kernel,
        out_shape=jax.ShapeDtypeStruct((M, Do), jnp.float32),
        grid=(1,),                     # single step: M=16 rows -> one TC, one MXU push
        in_specs=[
            pl.BlockSpec((M, Dp), lambda i: (0, 0)),   # full array (unpadded) blocks
            pl.BlockSpec((Dp, Do), lambda i: (0, 0)),
            pl.BlockSpec((N, Do), lambda i: (0, 0)),
        ],
        out_specs=pl.BlockSpec((M, Do), lambda i: (0, 0)),
        compiler_params=pltpu.CompilerParams(
            dimension_semantics=("arbitrary",),        # no megacore split at this size
        ),
        cost_estimate=pl.CostEstimate(                 # true (unpadded) shapes
            flops=2 * M * Dp * Do,
            transcendentals=0,
            bytes_accessed=4 * (M * Dp + Dp * Do + N * Do + M * Do),
        ),
    )(x2, w, posb)

    return out2.reshape(B, N, Do)      # contiguous reshape: no HBM copy


def init_params(key, num_patches, project_dim, patch_dim):
    """Deterministic synthetic parameters matching the torch module's shapes."""
    kw, kb, kp = jax.random.split(key, 3)
    scale = 1.0 / jnp.sqrt(jnp.float32(patch_dim))
    # Stored as (in, out) == W_torch.T so the kernel computes x @ W + b.
    w = jax.random.uniform(kw, (patch_dim, project_dim), jnp.float32,
                           minval=-scale, maxval=scale)
    b = jax.random.uniform(kb, (project_dim,), jnp.float32,
                           minval=-scale, maxval=scale)
    # torch.nn.Embedding default init ~ N(0, 1)
    pos_emb = jax.random.normal(kp, (num_patches, project_dim), jnp.float32)
    return w, b, pos_emb


def reference_forward(patch, w, b, pos_emb):
    # positions = arange(num_patches) -> embedding lookup is the full table.
    return patch @ w + b + pos_emb[None, :, :]


if __name__ == "__main__":
    batch = 2
    num_patches = 8      # e.g. 8 patches per image
    patch_dim = 48       # e.g. 4x4 patch, 3 channels
    project_dim = 32

    key = jax.random.PRNGKey(0)
    key, kx = jax.random.split(key)
    patch = jax.random.normal(kx, (batch, num_patches, patch_dim), jnp.float32)

    w, b, pos_emb = init_params(key, num_patches, project_dim, patch_dim)

    fwd = jax.jit(encode_patches_forward)
    out = fwd(patch, w, b, pos_emb)
    out = jax.block_until_ready(out)

    ref = reference_forward(patch, w, b, pos_emb)
    assert out.shape == (batch, num_patches, project_dim), out.shape
    assert jnp.allclose(out, ref, rtol=1e-4, atol=1e-4), "mismatch vs reference"

    print("KERNEL_OK")
</pallas_src>

<mosaic_0001>
module attributes {stable_mosaic.version = 11 : i64} {
  func.func @encode_patches_kernel(%arg0: i32, %arg1: memref<16x48xf32, #tpu.memory_space<vmem>>, %arg2: memref<48x32xf32, #tpu.memory_space<vmem>>, %arg3: memref<8x32xf32, #tpu.memory_space<vmem>>, %arg4: memref<16x32xf32, #tpu.memory_space<vmem>>) attributes {dimension_semantics = [#tpu.dimension_semantics<arbitrary>], iteration_bounds = array<i64: 1>, scalar_prefetch = 0 : i64, scratch_operands = 0 : i64, tpu.core_type = #tpu.core_type<tc>, window_params = [{pipeline_mode = #tpu.pipeline_mode<synchronous>, transform_indices = @transform_0, window_bounds = array<i64: 16, 48>}, {pipeline_mode = #tpu.pipeline_mode<synchronous>, transform_indices = @transform_1, window_bounds = array<i64: 48, 32>}, {pipeline_mode = #tpu.pipeline_mode<synchronous>, transform_indices = @transform_2, window_bounds = array<i64: 8, 32>}, {pipeline_mode = #tpu.pipeline_mode<synchronous>, transform_indices = @transform_3, window_bounds = array<i64: 16, 32>}]} {
    %c0 = arith.constant 0 : index
    %c0_0 = arith.constant 0 : index
    %0 = vector.load %arg1[%c0, %c0_0] : memref<16x48xf32, #tpu.memory_space<vmem>>, vector<16x48xf32>
    %c0_1 = arith.constant 0 : index
    %c0_2 = arith.constant 0 : index
    %1 = vector.load %arg2[%c0_1, %c0_2] : memref<48x32xf32, #tpu.memory_space<vmem>>, vector<48x32xf32>
    %cst = arith.constant dense<0.000000e+00> : vector<16x32xf32>
    %2 = tpu.matmul %0, %1, %cst {dimension_numbers = #tpu.dot_dimension_numbers<[1], [0], [0], [1], [0, 0, 1, 1], [], []>} : vector<16x48xf32>, vector<48x32xf32>, vector<16x32xf32> -> vector<16x32xf32>
    %c0_3 = arith.constant 0 : index
    %c0_4 = arith.constant 0 : index
    %3 = vector.load %arg3[%c0_3, %c0_4] : memref<8x32xf32, #tpu.memory_space<vmem>>, vector<8x32xf32>
    %4 = tpu.concatenate %3, %3 in 0 : vector<8x32xf32>, vector<8x32xf32> -> vector<16x32xf32>
    %5 = arith.addf %2, %4 : vector<16x32xf32>
    %c0_5 = arith.constant 0 : index
    %c0_6 = arith.constant 0 : index
    %6 = vector.load %arg4[%c0_5, %c0_6] : memref<16x32xf32, #tpu.memory_space<vmem>>, vector<16x32xf32>
    tpu.vector_store %arg4[%c0_5, %c0_6], %5 {strides = array<i32>} : memref<16x32xf32, #tpu.memory_space<vmem>>, vector<16x32xf32>,
    return
  }
  func.func @transform_0(%arg0: i32) -> (i32, i32) {
    %c0_i32 = arith.constant 0 : i32
    %c0_i32_0 = arith.constant 0 : i32
    %c0_i32_1 = arith.constant 0 : i32
    return %c0_i32, %c0_i32_0 : i32, i32
  }
  func.func @transform_1(%arg0: i32) -> (i32, i32) {
    %c0_i32 = arith.constant 0 : i32
    %c0_i32_0 = arith.constant 0 : i32
    %c0_i32_1 = arith.constant 0 : i32
    return %c0_i32, %c0_i32_0 : i32, i32
  }
  func.func @transform_2(%arg0: i32) -> (i32, i32) {
    %c0_i32 = arith.constant 0 : i32
    %c0_i32_0 = arith.constant 0 : i32
    %c0_i32_1 = arith.constant 0 : i32
    return %c0_i32, %c0_i32_0 : i32, i32
  }
  func.func @transform_3(%arg0: i32) -> (i32, i32) {
    %c0_i32 = arith.constant 0 : i32
    %c0_i32_0 = arith.constant 0 : i32
    %c0_i32_1 = arith.constant 0 : i32
    return %c0_i32, %c0_i32_0 : i32, i32
  }
}

</mosaic_0001>

<llo_original>
// kernel: encode_patches_forward.1
$region0: #{encode_patches_forward.1}
  #allocation0 [shape = 'u32[]', space=smem, size = 0x4, offset = 0x4, fixed_abs, tag = 'smem constant byte address 0x4 - core index']
  #allocation1 [shape = 'u32[144,128]{1,0:T(1,128)}', space=vmem, size = 0x12000, scoped, tag = 'internal scratch']
  %s0 = inlined_call_operand.vmem [shape: f32[16,48], index: 0, kind: input, shape index: {}]
  %s1 = inlined_call_operand.vmem [shape: f32[48,32], index: 1, kind: input, shape index: {}]
  %s2 = inlined_call_operand.vmem [shape: f32[8,32], index: 2, kind: input, shape index: {}]
  %s3 = inlined_call_operand.hbm [shape: f32[16,32], index: 3, kind: output, shape index: {}]
  %s4 = sld [smem:[#allocation0]]
  $region22: #{encode_patches_forward.1} parent=0
    _
  %s6 = ssub.s32 1, %s4
  %s7 = scalar_select 0, %s6, %s4
  $region1: #{encode_patches_forward.1} parent=0
    #allocation2 [shape = 'u8[8192]{0}', space=vmem, size = 0x2000, scoped, tag = 'output window, operand 0, single buffered']
    #allocation3 [shape = 's32[1]{0}', space=sflag, size = 0x4, scoped, tag = 'scoped memory for encode_patches_forward.1']
    %8 = vsyncpa [#allocation3], 0
    // Predicated region
    $region2: #{encode_patches_forward.1} parent=1 // pred_check
      _
    $region3: #{encode_patches_forward.1} parent=1 // pred_check_branch
      %10 = sbr.rel (0) target = $region5
    $region4: #{encode_patches_forward.1} parent=1 // pred_region
      _
    $region5: #{encode_patches_forward.1} parent=1 // pred_fallthru
      _
    // Predicated region
    $region6: #{encode_patches_forward.1} parent=1 // pred_check
      _
    $region7: #{encode_patches_forward.1} parent=1 // pred_check_branch
      %12 = sbr.rel (0) target = $region9
    $region8: #{encode_patches_forward.1} parent=1 // pred_region
      _
    $region9: #{encode_patches_forward.1} parent=1 // pred_fallthru
      _
    // Predicated region
    $region10: #{encode_patches_forward.1} parent=1 // pred_check
      _
    $region11: #{encode_patches_forward.1} parent=1 // pred_check_branch
      %14 = sbr.rel (0) target = $region13
    $region12: #{encode_patches_forward.1} parent=1 // pred_region
      _
    $region13: #{encode_patches_forward.1} parent=1 // pred_fallthru
      _
    %v15 = vld [vmem:[%s0] sm:$0xff]
    %v16 = vld [vmem:[%s0 + $0x8] sm:$0xff]
    %v17 = vld [vmem:[%s1] sm:$0xff]
    %v18 = vld [vmem:[%s1 + $0x8] sm:$0xff]
    %v19 = vld [vmem:[%s1 + $0x10] sm:$0xff]
    %v20 = vld [vmem:[%s1 + $0x18] sm:$0xff]
    %v21 = vld [vmem:[%s1 + $0x20] sm:$0xff]
    %v22 = vld [vmem:[%s1 + $0x28] sm:$0xff]
    %v23 = vld [vmem:[%s2] sm:$0xff]
    %vm24 = vcmask 392192
    %v26 = vsel %vm24, %v15, 0
    %v29 = vsel %vm24, %v16, 0
    %31 = vmatprep.subr.mxu0 0.0
    %32 = vmatpush1.msra.mxu0 0.0
    %33 = vmatprep.subr.mxu0 0.0
    %34 = vmatpush1.msra.mxu0 0.0
    %35 = vmatprep.subr.mxu0 0.0
    %36 = vmatpush1.msra.mxu0 0.0
    %37 = vmatprep.subr.mxu0 0.0
    %38 = vmatpush1.msra.mxu0 0.0
    %39 = vmatprep.subr.mxu0 0.0
    %40 = vmatpush1.msra.mxu0 0.0
    %41 = vmatprep.subr.mxu0 0.0
    %42 = vmatpush1.msra.mxu0 0.0
    %43 = vmatprep.subr.mxu0 0.0
    %44 = vmatpush1.msra.mxu0 0.0
    %45 = vmatprep.subr.mxu0 0.0
    %46 = vmatpush1.msra.mxu0 0.0
    %47 = vmatprep.subr.mxu0 0.0
    %48 = vmatpush1.msra.mxu0 0.0
    %49 = vmatprep.subr.mxu0 0.0
    %50 = vmatpush1.msra.mxu0 0.0
    %51 = vmatprep.subr.mxu0 0.0
    %52 = vmatpush1.msra.mxu0 %v22
    %53 = vmatprep.subr.mxu0 0.0
    %54 = vmatpush1.msra.mxu0 %v21
    %55 = vmatprep.subr.mxu0 0.0
    %56 = vmatpush1.msra.mxu0 %v20
    %57 = vmatprep.subr.mxu0 0.0
    %58 = vmatpush1.msra.mxu0 %v19
    %59 = vmatprep.subr.mxu0 0.0
    %60 = vmatpush1.msra.mxu0 %v18
    %61 = vmatprep.subr.mxu0 0.0
    %62 = vmatpush1.msra.mxu0 %v17
    %63 = vmatprep.subr.mxu0 0.0
    %64 = vmatpush2.msra.mxu0 0.0
    %65 = vmatprep.subr.mxu0 0.0
    %66 = vmatpush2.msra.mxu0 0.0
    %67 = vmatprep.subr.mxu0 0.0
    %68 = vmatpush2.msra.mxu0 0.0
    %69 = vmatprep.subr.mxu0 0.0
    %70 = vmatpush2.msra.mxu0 0.0
    %71 = vmatprep.subr.mxu0 0.0
    %72 = vmatpush2.msra.mxu0 0.0
    %73 = vmatprep.subr.mxu0 0.0
    %74 = vmatpush2.msra.mxu0 0.0
    %75 = vmatprep.subr.mxu0 0.0
    %76 = vmatpush2.msra.mxu0 0.0
    %77 = vmatprep.subr.mxu0 0.0
    %78 = vmatpush2.msra.mxu0 0.0
    %79 = vmatprep.subr.mxu0 0.0
    %80 = vmatpush2.msra.mxu0 0.0
    %81 = vmatprep.subr.mxu0 0.0
    %82 = vmatpush2.msra.mxu0 0.0
    %83 = vmatprep.subr.mxu0 0.0
    %84 = vmatpush2.msra.mxu0 0.0
    %85 = vmatprep.subr.mxu0 0.0
    %86 = vmatpush2.msra.mxu0 0.0
    %87 = vmatprep.subr.mxu0 0.0
    %88 = vmatpush2.msra.mxu0 0.0
    %89 = vmatprep.subr.mxu0 0.0
    %90 = vmatpush2.msra.mxu0 0.0
    %91 = vmatprep.subr.mxu0 0.0
    %92 = vmatpush2.msra.mxu0 0.0
    %93 = vmatprep.subr.mxu0 0.0
    %94 = vmatpush2.msra.mxu0 0.0
    %95 = vmatprep.mubr.f32.mxu0 0.0
    %96 = vmatmul.mubr.f32.gmra.mxu0 %v26
    %v97 = vpop.f32.mrf.mxu0
    %v98 = vadd.f32 %v23, %v97
    %v99 = vpop.f32.mrf.mxu0
    %100 = vmatprep.mubr.f32.mxu0 0.0
    %101 = vmatmul.mubr.f32.gmra.mxu0 %v29
    %v102 = vpop.f32.mrf.mxu0
    %v103 = vadd.f32 %v23, %v102
    %v104 = vpop.f32.mrf.mxu0
    %105 = vdwg.mxu0
    %vm106 = vcmask 261120
    %107 = vst.msk [vmem:[#allocation2] sm:$0xff] %vm106, %v98
    %108 = vst.msk [vmem:[#allocation2 + $0x8] sm:$0xff] %vm106, %v103
    // Predicated region
    $region14: #{encode_patches_forward.1} parent=1 // pred_check
      _
    $region15: #{encode_patches_forward.1} parent=1 // pred_check_branch
      %110 = sbr.rel (0) target = $region17
    $region16: #{encode_patches_forward.1} parent=1 // pred_region
      %s112 = ssub.s32 256, 256
      %113 = vsyncadd [#allocation3], %s112
      %s114 = sshll.u32 [#allocation2], 4
      %s115 = int_to_ptr.vmem [resolvable:$true] %s114
      %120 = dma.vmem_to_hbm [thread:$0]  %s115, 256, %s3, [#allocation3], 128, 128, 8
    $region17: #{encode_patches_forward.1} parent=1 // pred_fallthru
      _
    // Predicated region
    $region18: #{encode_patches_forward.1} parent=1 // pred_check
      _
    $region19: #{encode_patches_forward.1} parent=1 // pred_check_branch
      %122 = sbr.rel (0) target = $region21
    $region20: #{encode_patches_forward.1} parent=1 // pred_region
      %123 = dma.done [#allocation3], 256
    $region21: #{encode_patches_forward.1} parent=1 // pred_fallthru
      _
    %124 = vsyncpa [#allocation3], 1

</llo_original>
